<compile_context>
chip_gen: v7x
topology: tpu7x:2x2x1
jax: 0.10.0
libtpu: 0.0.40
codegen_flags: <defaults>
</compile_context>

<pallas_src>
import functools

import jax
import jax.numpy as jnp
from jax.experimental import pallas as pl
from jax.experimental.pallas import tpu as pltpu

LANE = 128
_VMEM_LIMIT = 48 * 1024 * 1024        # scoped-VMEM budget (fits v5e/v6e/v7x)
_XW_RESIDENT_MAX_BYTES = 8 * 1024 * 1024   # double-buffered => <=16 MiB in VMEM


def _round_up(v, m):
    return (v + m - 1) // m * m


def _choose_tiling(n):
    """Pick (n_pad, tn, tk) with tk | tn | n_pad, all multiples of 256."""
    if n <= 512:
        tn = tk = 256
    elif n <= 1024:
        tn = tk = 512
    else:
        tn, tk = 1024, 512
    n_pad = _round_up(n, tn)
    return n_pad, tn, tk


# ----------------------------------------------------------------------------
# Kernel 1: XW = X @ W  (once per layer; bf16 output for the bf16 MXU path)
# ----------------------------------------------------------------------------
def xw_kernel(x_ref, w_ref, o_ref):
    o_ref[...] = jnp.dot(
        x_ref[...].astype(jnp.bfloat16),
        w_ref[...],
        preferred_element_type=jnp.float32,
    ).astype(o_ref.dtype)


def compute_xw(x, w, *, tm=512):
    n, f_in = x.shape
    f_out = w.shape[1]
    tm = min(tm, n)
    return pl.pallas_call(
        xw_kernel,
        out_shape=jax.ShapeDtypeStruct((n, f_out), jnp.bfloat16),
        grid_spec=pltpu.PrefetchScalarGridSpec(
            num_scalar_prefetch=0,
            grid=(pl.cdiv(n, tm),),
            in_specs=[
                pl.BlockSpec((tm, f_in), lambda i: (i, 0)),      # X row stripe
                pl.BlockSpec((f_in, f_out), lambda i: (0, 0)),   # full W (small)
            ],
            out_specs=pl.BlockSpec((tm, f_out), lambda i: (i, 0)),
        ),
        compiler_params=pltpu.CompilerParams(
            dimension_semantics=("parallel",),
            vmem_limit_bytes=_VMEM_LIMIT,
        ),
    )(x, w)


# ----------------------------------------------------------------------------
# Kernel 2: out = act(Ahat @ XW + b)   — row-parallel x column-reduction grid
# ----------------------------------------------------------------------------
def agg_kernel(adj_ref, xw_ref, b_ref, o_ref, *scratch,
               apply_act, tk, xw_resident):
    # Accumulate directly into the (k-resident) output tile when it is f32,
    # otherwise (bf16 intermediate layers) use the f32 VMEM scratch.
    acc_ref = scratch[0] if scratch else o_ref
    k = pl.program_id(1)

    @pl.when(k == 0)
    def _():
        acc_ref[...] = jnp.zeros_like(acc_ref)

    if xw_resident:
        start = pl.multiple_of(k * tk, tk)
        xw_blk = xw_ref[pl.ds(start, tk), :]   # VMEM-resident XW, sliced per k
    else:
        xw_blk = xw_ref[...]                   # streamed (tk, F) tile

    acc_ref[...] += jnp.dot(
        adj_ref[...], xw_blk, preferred_element_type=jnp.float32
    )

    @pl.when(k == pl.num_programs(1) - 1)
    def _():
        out = acc_ref[...] + b_ref[...]        # b is (1, F_pad), broadcasts
        if apply_act:                          # static python flag (ReLU)
            out = jnp.maximum(out, 0.0)
        o_ref[...] = out.astype(o_ref.dtype)


def gcn_aggregate(adj, xw, b, *, apply_act, tn, tk):
    n_pad = adj.shape[0]
    f_out = xw.shape[1]

    # Intermediate layers: bf16 activations (next layer casts to bf16 anyway).
    out_dtype = jnp.bfloat16 if apply_act else jnp.float32
    use_scratch = out_dtype != jnp.float32

    # XW VMEM-resident when small enough (single constant-index DMA, no
    # re-streaming per row tile). Size-capped for v7x's 64 MiB VMEM.
    xw_resident = (n_pad * f_out * xw.dtype.itemsize) <= _XW_RESIDENT_MAX_BYTES
    if xw_resident:
        xw_spec = pl.BlockSpec((n_pad, f_out), lambda i, k: (0, 0))
    else:
        xw_spec = pl.BlockSpec((tk, f_out), lambda i, k: (k, 0))

    kernel = functools.partial(
        agg_kernel, apply_act=apply_act, tk=tk, xw_resident=xw_resident
    )
    scratch_shapes = [pltpu.VMEM((tn, f_out), jnp.float32)] if use_scratch else []

    return pl.pallas_call(
        kernel,
        out_shape=jax.ShapeDtypeStruct((n_pad, f_out), out_dtype),
        grid_spec=pltpu.PrefetchScalarGridSpec(
            num_scalar_prefetch=0,
            grid=(n_pad // tn, n_pad // tk),
            in_specs=[
                pl.BlockSpec((tn, tk), lambda i, k: (i, k)),     # Ahat tile (bf16)
                xw_spec,                                         # XW (bf16)
                pl.BlockSpec((1, f_out), lambda i, k: (0, 0)),   # bias (f32)
            ],
            out_specs=pl.BlockSpec((tn, f_out), lambda i, k: (i, 0)),
            scratch_shapes=scratch_shapes,
        ),
        compiler_params=pltpu.CompilerParams(
            dimension_semantics=("parallel", "arbitrary"),
            vmem_limit_bytes=_VMEM_LIMIT,
        ),
    )(adj, xw, b)


# ----------------------------------------------------------------------------
# Glue: densify + symmetric-normalize the adjacency (GCNConv normalization)
# ----------------------------------------------------------------------------
def build_norm_adj(edge_index, n, n_pad, dtype=jnp.bfloat16):
    """edge_index: [2, E] int32. Returns D^{-1/2}(A+I)D^{-1/2}, (n_pad, n_pad)."""
    row, col = edge_index[0], edge_index[1]
    # Build directly at padded size; normalize + cast fused into one expression.
    a = jnp.zeros((n_pad, n_pad), jnp.float32).at[row, col].add(1.0)
    # add_remaining_self_loops: nodes with an existing self-loop keep its weight.
    idx = jnp.arange(n)
    diag = a[idx, idx]
    a = a.at[idx, idx].set(jnp.where(diag > 0, diag, 1.0))
    deg = a.sum(axis=1)
    d_inv_sqrt = jnp.where(deg > 0, jax.lax.rsqrt(deg), 0.0)
    return (a * d_inv_sqrt[:, None] * d_inv_sqrt[None, :]).astype(dtype)


# ----------------------------------------------------------------------------
# Encoder forward (gcn-align branch, eval mode: feat_drop is identity)
# ----------------------------------------------------------------------------
def encoder_forward(edges, x, weights, biases):
    # edges: [E, 2] -> transpose, matching `edges = edges.t()` in the module.
    edge_index = edges.T
    n, f_in = x.shape
    num_layers = len(weights)
    dims = [f_in] + [w.shape[1] for w in weights]
    dims_pad = [_round_up(d, LANE) for d in dims]

    n_pad, tn, tk = _choose_tiling(n)
    adj = build_norm_adj(edge_index, n, n_pad)

    # Zero-pad features to lane-dense width; padded feature columns stay zero
    # through every layer (zero W rows / zero bias / ReLU(0)=0); slice at end.
    x = jnp.pad(x, ((0, n_pad - n), (0, dims_pad[0] - dims[0])))
    for l in range(num_layers):
        w = jnp.pad(
            weights[l],
            ((0, dims_pad[l] - dims[l]), (0, dims_pad[l + 1] - dims[l + 1])),
        ).astype(jnp.bfloat16)
        b = jnp.pad(
            biases[l].reshape(1, -1),
            ((0, 0), (0, dims_pad[l + 1] - dims[l + 1])),
        ).astype(jnp.float32)
        # F.dropout(x, p=feat_drop, training=False) == identity
        xw = compute_xw(x, w)                              # hoisted X@W (bf16)
        x = gcn_aggregate(
            adj, xw, b,
            apply_act=(l != num_layers - 1),
            tn=tn, tk=tk,
        )
    return x[:n, :dims[-1]].astype(jnp.float32)


# ----------------------------------------------------------------------------
# Deterministic parameter init + smoke test
# ----------------------------------------------------------------------------
if __name__ == "__main__":
    key = jax.random.PRNGKey(0)
    k_edges, k_x, k_w = jax.random.split(key, 3)

    N, E = 128, 256                  # nodes, edges
    hiddens = [32, 32, 32]           # Encoder(hiddens=...) -> num_layers = 2

    edges = jax.random.randint(k_edges, (E, 2), 0, N, dtype=jnp.int32)
    x = jax.random.normal(k_x, (N, hiddens[0]), dtype=jnp.float32)

    weights, biases = [], []
    for l in range(len(hiddens) - 1):
        kw = jax.random.fold_in(k_w, l)
        limit = (6.0 / (hiddens[l] + hiddens[l + 1])) ** 0.5  # glorot uniform
        weights.append(jax.random.uniform(
            kw, (hiddens[l], hiddens[l + 1]), jnp.float32, -limit, limit))
        biases.append(jnp.zeros((hiddens[l + 1],), jnp.float32))

    out = encoder_forward(edges, x, weights, biases)
    jax.block_until_ready(out)
    assert out.shape == (N, hiddens[-1]) and out.dtype == jnp.float32
    print("KERNEL_OK")
</pallas_src>

<mosaic_0001>
module attributes {stable_mosaic.version = 11 : i64} {
  func.func @xw_kernel(%arg0: i32, %arg1: memref<256x128xf32, #tpu.memory_space<vmem>>, %arg2: memref<128x128xbf16, #tpu.memory_space<vmem>>, %arg3: memref<256x128xbf16, #tpu.memory_space<vmem>>) attributes {dimension_semantics = [#tpu.dimension_semantics<parallel>], iteration_bounds = array<i64: 1>, scalar_prefetch = 0 : i64, scratch_operands = 0 : i64, tpu.core_type = #tpu.core_type<tc>, window_params = [{transform_indices = @transform_0, window_bounds = array<i64: 256, 128>}, {pipeline_mode = #tpu.pipeline_mode<synchronous>, transform_indices = @transform_1, window_bounds = array<i64: 128, 128>}, {transform_indices = @transform_2, window_bounds = array<i64: 256, 128>}]} {
    %c0 = arith.constant 0 : index
    %c0_0 = arith.constant 0 : index
    %0 = vector.load %arg1[%c0, %c0_0] : memref<256x128xf32, #tpu.memory_space<vmem>>, vector<256x128xf32>
    %1 = arith.truncf %0 : vector<256x128xf32> to vector<256x128xbf16>
    %c0_1 = arith.constant 0 : index
    %c0_2 = arith.constant 0 : index
    %2 = vector.load %arg2[%c0_1, %c0_2] : memref<128x128xbf16, #tpu.memory_space<vmem>>, vector<128x128xbf16>
    %cst = arith.constant dense<0.000000e+00> : vector<256x128xf32>
    %3 = tpu.matmul %1, %2, %cst {dimension_numbers = #tpu.dot_dimension_numbers<[1], [0], [0], [1], [0, 0, 1, 1], [], []>} : vector<256x128xbf16>, vector<128x128xbf16>, vector<256x128xf32> -> vector<256x128xf32>
    %4 = arith.truncf %3 : vector<256x128xf32> to vector<256x128xbf16>
    %c0_3 = arith.constant 0 : index
    %c0_4 = arith.constant 0 : index
    %5 = vector.load %arg3[%c0_3, %c0_4] : memref<256x128xbf16, #tpu.memory_space<vmem>>, vector<256x128xbf16>
    tpu.vector_store %arg3[%c0_3, %c0_4], %4 {strides = array<i32>} : memref<256x128xbf16, #tpu.memory_space<vmem>>, vector<256x128xbf16>,
    return
  }
  func.func @transform_0(%arg0: i32) -> (i32, i32) {
    %c0_i32 = arith.constant 0 : i32
    %c0_i32_0 = arith.constant 0 : i32
    return %arg0, %c0_i32 : i32, i32
  }
  func.func @transform_1(%arg0: i32) -> (i32, i32) {
    %c0_i32 = arith.constant 0 : i32
    %c0_i32_0 = arith.constant 0 : i32
    %c0_i32_1 = arith.constant 0 : i32
    return %c0_i32, %c0_i32_0 : i32, i32
  }
  func.func @transform_2(%arg0: i32) -> (i32, i32) {
    %c0_i32 = arith.constant 0 : i32
    %c0_i32_0 = arith.constant 0 : i32
    return %arg0, %c0_i32 : i32, i32
  }
}

</mosaic_0001>

<llo_original>
// kernel: tpu_custom_call.1
$region0: #{tpu_custom_call.1}
  #allocation0 [shape = 'u32[]', space=smem, size = 0x4, offset = 0x4, fixed_abs, tag = 'smem constant byte address 0x4 - core index']
  #allocation1 [shape = 'u32[144,128]{1,0:T(1,128)}', space=vmem, size = 0x12000, scoped, tag = 'internal scratch']
  %s0 = inlined_call_operand.hbm [shape: f32[256,128], index: 0, kind: input, shape index: {}]
  %s1 = inlined_call_operand.hbm [shape: bf16[128,128], index: 1, kind: input, shape index: {}]
  %s2 = inlined_call_operand.hbm [shape: bf16[256,128], index: 2, kind: output, shape index: {}]
  %s3 = sld [smem:[#allocation0]]
  $region26: #{tpu_custom_call.1} parent=0
    _
  %s5 = ssub.s32 1, %s3
  %s6 = scalar_select 0, %s5, %s3
  $region1: #{tpu_custom_call.1} parent=0
    #allocation2 [shape = 'u8[131072]{0}', space=vmem, size = 0x20000, scoped, tag = 'input window, operand 0, single buffered']
    #allocation3 [shape = 's32[1]{0}', space=sflag, size = 0x4, scoped, tag = 'scoped memory for tpu_custom_call.1']
    #allocation4 [shape = 's32[1]{0}', space=sflag, size = 0x4, scoped, tag = 'scoped memory for tpu_custom_call.1']
    #allocation5 [shape = 'u8[32768]{0}', space=vmem, size = 0x8000, scoped, tag = 'input window, operand 1, single buffered']
    #allocation6 [shape = 's32[1]{0}', space=sflag, size = 0x4, scoped, tag = 'scoped memory for tpu_custom_call.1']
    #allocation7 [shape = 'u8[65536]{0}', space=vmem, size = 0x10000, scoped, tag = 'output window, operand 0, single buffered']
    %7 = vsyncpa [#allocation3], 0
    %8 = vsyncpa [#allocation6], 0
    %9 = vsyncpa [#allocation4], 0
    // Predicated region
    $region2: #{tpu_custom_call.1} parent=1 // pred_check
      _
    $region3: #{tpu_custom_call.1} parent=1 // pred_check_branch
      %11 = sbr.rel (0) target = $region5
    $region4: #{tpu_custom_call.1} parent=1 // pred_region
      %s13 = ssub.s32 4096, 4096
      %14 = vsyncadd [#allocation3], %s13
      %s15 = sshll.u32 [#allocation2], 4
      %s16 = int_to_ptr.vmem [resolvable:$true] %s15
      %21 = dma.hbm_to_vmem [thread:$0]  %s0, 4096, %s16, [#allocation3], 128, 128, 8
    $region5: #{tpu_custom_call.1} parent=1 // pred_fallthru
      _
    // Predicated region
    $region6: #{tpu_custom_call.1} parent=1 // pred_check
      _
    $region7: #{tpu_custom_call.1} parent=1 // pred_check_branch
      %23 = sbr.rel (0) target = $region9
    $region8: #{tpu_custom_call.1} parent=1 // pred_region
      %s25 = ssub.s32 1024, 1024
      %26 = vsyncadd [#allocation6], %s25
      %s27 = sshll.u32 [#allocation5], 4
      %s28 = int_to_ptr.vmem [resolvable:$true] %s27
      %33 = dma.hbm_to_vmem [thread:$0]  %s1, 1024, %s28, [#allocation6], 64, 64, 4
    $region9: #{tpu_custom_call.1} parent=1 // pred_fallthru
      _
    // Predicated region
    $region10: #{tpu_custom_call.1} parent=1 // pred_check
      _
    $region11: #{tpu_custom_call.1} parent=1 // pred_check_branch
      %35 = sbr.rel (0) target = $region13
    $region12: #{tpu_custom_call.1} parent=1 // pred_region
      %36 = dma.done [#allocation3], 4096
    $region13: #{tpu_custom_call.1} parent=1 // pred_fallthru
      _
    // Predicated region
    $region14: #{tpu_custom_call.1} parent=1 // pred_check
      _
    $region15: #{tpu_custom_call.1} parent=1 // pred_check_branch
      %38 = sbr.rel (0) target = $region17
    $region16: #{tpu_custom_call.1} parent=1 // pred_region
      %39 = dma.done [#allocation6], 1024
    $region17: #{tpu_custom_call.1} parent=1 // pred_fallthru
      _
    %v41 = vld [vmem:[#allocation2] sm:$0xff]
    %v42 = vld [vmem:[#allocation2 + $0x8] sm:$0xff]
    %v43 = vld [vmem:[#allocation2 + $0x10] sm:$0xff]
    %v44 = vld [vmem:[#allocation2 + $0x18] sm:$0xff]
    %v45 = vld [vmem:[#allocation2 + $0x20] sm:$0xff]
    %v46 = vld [vmem:[#allocation2 + $0x28] sm:$0xff]
    %v47 = vld [vmem:[#allocation2 + $0x30] sm:$0xff]
    %v48 = vld [vmem:[#allocation2 + $0x38] sm:$0xff]
    %v49 = vld [vmem:[#allocation2 + $0x40] sm:$0xff]
    %v50 = vld [vmem:[#allocation2 + $0x48] sm:$0xff]
    %v51 = vld [vmem:[#allocation2 + $0x50] sm:$0xff]
    %v52 = vld [vmem:[#allocation2 + $0x58] sm:$0xff]
    %v53 = vld [vmem:[#allocation2 + $0x60] sm:$0xff]
    %v54 = vld [vmem:[#allocation2 + $0x68] sm:$0xff]
    %v55 = vld [vmem:[#allocation2 + $0x70] sm:$0xff]
    %v56 = vld [vmem:[#allocation2 + $0x78] sm:$0xff]
    %v57 = vld [vmem:[#allocation2 + $0x80] sm:$0xff]
    %v58 = vld [vmem:[#allocation2 + $0x88] sm:$0xff]
    %v59 = vld [vmem:[#allocation2 + $0x90] sm:$0xff]
    %v60 = vld [vmem:[#allocation2 + $0x98] sm:$0xff]
    %v61 = vld [vmem:[#allocation2 + $0xa0] sm:$0xff]
    %v62 = vld [vmem:[#allocation2 + $0xa8] sm:$0xff]
    %v63 = vld [vmem:[#allocation2 + $0xb0] sm:$0xff]
    %v64 = vld [vmem:[#allocation2 + $0xb8] sm:$0xff]
    %v65 = vld [vmem:[#allocation2 + $0xc0] sm:$0xff]
    %v66 = vld [vmem:[#allocation2 + $0xc8] sm:$0xff]
    %v67 = vld [vmem:[#allocation2 + $0xd0] sm:$0xff]
    %v68 = vld [vmem:[#allocation2 + $0xd8] sm:$0xff]
    %v69 = vld [vmem:[#allocation2 + $0xe0] sm:$0xff]
    %v70 = vld [vmem:[#allocation2 + $0xe8] sm:$0xff]
    %v71 = vld [vmem:[#allocation2 + $0xf0] sm:$0xff]
    %v72 = vld [vmem:[#allocation2 + $0xf8] sm:$0xff]
    %v73 = vpack.c.bf16 %v42, %v41
    %v74 = vpack.c.bf16 %v44, %v43
    %v75 = vpack.c.bf16 %v46, %v45
    %v76 = vpack.c.bf16 %v48, %v47
    %v77 = vpack.c.bf16 %v50, %v49
    %v78 = vpack.c.bf16 %v52, %v51
    %v79 = vpack.c.bf16 %v54, %v53
    %v80 = vpack.c.bf16 %v56, %v55
    %v81 = vpack.c.bf16 %v58, %v57
    %v82 = vpack.c.bf16 %v60, %v59
    %v83 = vpack.c.bf16 %v62, %v61
    %v84 = vpack.c.bf16 %v64, %v63
    %v85 = vpack.c.bf16 %v66, %v65
    %v86 = vpack.c.bf16 %v68, %v67
    %v87 = vpack.c.bf16 %v70, %v69
    %v88 = vpack.c.bf16 %v72, %v71
    %v89 = vld [vmem:[#allocation5] sm:$0xf]
    %v90 = vld [vmem:[#allocation5 + $0x4] sm:$0xf]
    %v91 = vld [vmem:[#allocation5 + $0x8] sm:$0xf]
    %v92 = vld [vmem:[#allocation5 + $0xc] sm:$0xf]
    %v93 = vld [vmem:[#allocation5 + $0x10] sm:$0xf]
    %v94 = vld [vmem:[#allocation5 + $0x14] sm:$0xf]
    %v95 = vld [vmem:[#allocation5 + $0x18] sm:$0xf]
    %v96 = vld [vmem:[#allocation5 + $0x1c] sm:$0xf]
    %v97 = vld [vmem:[#allocation5 + $0x20] sm:$0xf]
    %v98 = vld [vmem:[#allocation5 + $0x24] sm:$0xf]
    %v99 = vld [vmem:[#allocation5 + $0x28] sm:$0xf]
    %v100 = vld [vmem:[#allocation5 + $0x2c] sm:$0xf]
    %v101 = vld [vmem:[#allocation5 + $0x30] sm:$0xf]
    %v102 = vld [vmem:[#allocation5 + $0x34] sm:$0xf]
    %v103 = vld [vmem:[#allocation5 + $0x38] sm:$0xf]
    %v104 = vld [vmem:[#allocation5 + $0x3c] sm:$0xf]
    %v121 = vunpack.c.l.b16 %v89
    %v122 = vunpack.c.l.b16 %v90
    %v123 = vunpack.c.l.b16 %v91
    %v124 = vunpack.c.l.b16 %v92
    %v125 = vunpack.c.l.b16 %v93
    %v126 = vunpack.c.l.b16 %v94
    %v127 = vunpack.c.l.b16 %v95
    %v128 = vunpack.c.l.b16 %v96
    %v129 = vunpack.c.l.b16 %v97
    %v130 = vunpack.c.l.b16 %v98
    %v131 = vunpack.c.l.b16 %v99
    %v132 = vunpack.c.l.b16 %v100
    %v133 = vunpack.c.l.b16 %v101
    %v134 = vunpack.c.l.b16 %v102
    %v135 = vunpack.c.l.b16 %v103
    %v136 = vunpack.c.l.b16 %v104
    %v137 = vpack.c.b16 %v122, %v121
    %v138 = vpack.c.b16 %v124, %v123
    %v139 = vpack.c.b16 %v126, %v125
    %v140 = vpack.c.b16 %v128, %v127
    %v141 = vpack.c.b16 %v130, %v129
    %v142 = vpack.c.b16 %v132, %v131
    %v143 = vpack.c.b16 %v134, %v133
    %v144 = vpack.c.b16 %v136, %v135
    %153 = vmatprep.subr.bf16.mxu0 0
    %154 = vmatpush1.bf16.msra.mxu0 %v137
    %155 = vmatprep.subr.bf16.mxu0 0
    %156 = vmatpush1.bf16.msra.mxu0 %v138
    %157 = vmatprep.subr.bf16.mxu0 0
    %158 = vmatpush1.bf16.msra.mxu0 %v139
    %159 = vmatprep.subr.bf16.mxu0 0
    %160 = vmatpush1.bf16.msra.mxu0 %v140
    %161 = vmatprep.subr.bf16.mxu0 0
    %162 = vmatpush1.bf16.msra.mxu0 %v141
    %163 = vmatprep.subr.bf16.mxu0 0
    %164 = vmatpush1.bf16.msra.mxu0 %v142
    %165 = vmatprep.subr.bf16.mxu0 0
    %166 = vmatpush1.bf16.msra.mxu0 %v143
    %167 = vmatprep.subr.bf16.mxu0 0
    %168 = vmatpush1.bf16.msra.mxu0 %v144
    %169 = vmatprep.subr.bf16.mxu0 0
    %170 = vmatpush1.bf16.msra.mxu0 0
    %171 = vmatprep.subr.bf16.mxu0 0
    %172 = vmatpush1.bf16.msra.mxu0 0
    %173 = vmatprep.subr.bf16.mxu0 0
    %174 = vmatpush1.bf16.msra.mxu0 0
    %175 = vmatprep.subr.bf16.mxu0 0
    %176 = vmatpush1.bf16.msra.mxu0 0
    %177 = vmatprep.subr.bf16.mxu0 0
    %178 = vmatpush1.bf16.msra.mxu0 0
    %179 = vmatprep.subr.bf16.mxu0 0
    %180 = vmatpush1.bf16.msra.mxu0 0
    %181 = vmatprep.subr.bf16.mxu0 0
    %182 = vmatpush1.bf16.msra.mxu0 0
    %183 = vmatprep.subr.bf16.mxu0 0
    %184 = vmatpush1.bf16.msra.mxu0 0
    %185 = vmatprep.mubr.bf16.mxu0 0
    %186 = vmatmul.mubr.bf16.gmra.mrb[0].mxu0 %v73
    %v187 = vpop.f32.mrb[0].mxu0
    %v188 = vadd.f32 0.0, %v187
    %v189 = vpop.f32.mrb[0].mxu0
    %v190 = vpop.f32.mrb[0].mxu0
    %v191 = vadd.f32 0.0, %v190
    %v192 = vpop.f32.mrb[0].mxu0
    %193 = vmatprep.mubr.bf16.mxu0 0
    %194 = vmatmul.mubr.bf16.gmra.mrb[0].mxu0 %v74
    %v195 = vpop.f32.mrb[0].mxu0
    %v196 = vadd.f32 0.0, %v195
    %v197 = vpop.f32.mrb[0].mxu0
    %v198 = vpop.f32.mrb[0].mxu0
    %v199 = vadd.f32 0.0, %v198
    %v200 = vpop.f32.mrb[0].mxu0
    %201 = vmatprep.mubr.bf16.mxu0 0
    %202 = vmatmul.mubr.bf16.gmra.mrb[0].mxu0 %v75
    %v203 = vpop.f32.mrb[0].mxu0
    %v204 = vadd.f32 0.0, %v203
    %v205 = vpop.f32.mrb[0].mxu0
    %v206 = vpop.f32.mrb[0].mxu0
    %v207 = vadd.f32 0.0, %v206
    %v208 = vpop.f32.mrb[0].mxu0
    %209 = vmatprep.mubr.bf16.mxu0 0
    %210 = vmatmul.mubr.bf16.gmra.mrb[0].mxu0 %v76
    %v211 = vpop.f32.mrb[0].mxu0
    %v212 = vadd.f32 0.0, %v211
    %v213 = vpop.f32.mrb[0].mxu0
    %v214 = vpop.f32.mrb[0].mxu0
    %v215 = vadd.f32 0.0, %v214
    %v216 = vpop.f32.mrb[0].mxu0
    %217 = vmatprep.mubr.bf16.mxu0 0
    %218 = vmatmul.mubr.bf16.gmra.mrb[0].mxu0 %v77
    %v219 = vpop.f32.mrb[0].mxu0
    %v220 = vadd.f32 0.0, %v219
    %v221 = vpop.f32.mrb[0].mxu0
    %v222 = vpop.f32.mrb[0].mxu0
    %v223 = vadd.f32 0.0, %v222
    %v224 = vpop.f32.mrb[0].mxu0
    %225 = vmatprep.mubr.bf16.mxu0 0
    %226 = vmatmul.mubr.bf16.gmra.mrb[0].mxu0 %v78
    %v227 = vpop.f32.mrb[0].mxu0
    %v228 = vadd.f32 0.0, %v227
    %v229 = vpop.f32.mrb[0].mxu0
    %v230 = vpop.f32.mrb[0].mxu0
    %v231 = vadd.f32 0.0, %v230
    %v232 = vpop.f32.mrb[0].mxu0
    %233 = vmatprep.mubr.bf16.mxu0 0
    %234 = vmatmul.mubr.bf16.gmra.mrb[0].mxu0 %v79
    %v235 = vpop.f32.mrb[0].mxu0
    %v236 = vadd.f32 0.0, %v235
    %v237 = vpop.f32.mrb[0].mxu0
    %v238 = vpop.f32.mrb[0].mxu0
    %v239 = vadd.f32 0.0, %v238
    %v240 = vpop.f32.mrb[0].mxu0
    %241 = vmatprep.mubr.bf16.mxu0 0
    %242 = vmatmul.mubr.bf16.gmra.mrb[0].mxu0 %v80
    %v243 = vpop.f32.mrb[0].mxu0
    %v244 = vadd.f32 0.0, %v243
    %v245 = vpop.f32.mrb[0].mxu0
    %v246 = vpop.f32.mrb[0].mxu0
    %v247 = vadd.f32 0.0, %v246
    %v248 = vpop.f32.mrb[0].mxu0
    %249 = vmatprep.mubr.bf16.mxu0 0
    %250 = vmatmul.mubr.bf16.gmra.mrb[0].mxu0 %v81
    %v251 = vpop.f32.mrb[0].mxu0
    %v252 = vadd.f32 0.0, %v251
    %v253 = vpop.f32.mrb[0].mxu0
    %v254 = vpop.f32.mrb[0].mxu0
    %v255 = vadd.f32 0.0, %v254
    %v256 = vpop.f32.mrb[0].mxu0
    %257 = vmatprep.mubr.bf16.mxu0 0
    %258 = vmatmul.mubr.bf16.gmra.mrb[0].mxu0 %v82
    %v259 = vpop.f32.mrb[0].mxu0
    %v260 = vadd.f32 0.0, %v259
    %v261 = vpop.f32.mrb[0].mxu0
    %v262 = vpop.f32.mrb[0].mxu0
    %v263 = vadd.f32 0.0, %v262
    %v264 = vpop.f32.mrb[0].mxu0
    %265 = vmatprep.mubr.bf16.mxu0 0
    %266 = vmatmul.mubr.bf16.gmra.mrb[0].mxu0 %v83
    %v267 = vpop.f32.mrb[0].mxu0
    %v268 = vadd.f32 0.0, %v267
    %v269 = vpop.f32.mrb[0].mxu0
    %v270 = vpop.f32.mrb[0].mxu0
    %v271 = vadd.f32 0.0, %v270
    %v272 = vpop.f32.mrb[0].mxu0
    %273 = vmatprep.mubr.bf16.mxu0 0
    %274 = vmatmul.mubr.bf16.gmra.mrb[0].mxu0 %v84
    %v275 = vpop.f32.mrb[0].mxu0
    %v276 = vadd.f32 0.0, %v275
    %v277 = vpop.f32.mrb[0].mxu0
    %v278 = vpop.f32.mrb[0].mxu0
    %v279 = vadd.f32 0.0, %v278
    %v280 = vpop.f32.mrb[0].mxu0
    %281 = vmatprep.mubr.bf16.mxu0 0
    %282 = vmatmul.mubr.bf16.gmra.mrb[0].mxu0 %v85
    %v283 = vpop.f32.mrb[0].mxu0
    %v284 = vadd.f32 0.0, %v283
    %v285 = vpop.f32.mrb[0].mxu0
    %v286 = vpop.f32.mrb[0].mxu0
    %v287 = vadd.f32 0.0, %v286
    %v288 = vpop.f32.mrb[0].mxu0
    %289 = vmatprep.mubr.bf16.mxu0 0
    %290 = vmatmul.mubr.bf16.gmra.mrb[0].mxu0 %v86
    %v291 = vpop.f32.mrb[0].mxu0
    %v292 = vadd.f32 0.0, %v291
    %v293 = vpop.f32.mrb[0].mxu0
    %v294 = vpop.f32.mrb[0].mxu0
    %v295 = vadd.f32 0.0, %v294
    %v296 = vpop.f32.mrb[0].mxu0
    %297 = vmatprep.mubr.bf16.mxu0 0
    %298 = vmatmul.mubr.bf16.gmra.mrb[0].mxu0 %v87
    %v299 = vpop.f32.mrb[0].mxu0
    %v300 = vadd.f32 0.0, %v299
    %v301 = vpop.f32.mrb[0].mxu0
    %v302 = vpop.f32.mrb[0].mxu0
    %v303 = vadd.f32 0.0, %v302
    %v304 = vpop.f32.mrb[0].mxu0
    %305 = vmatprep.mubr.bf16.mxu0 0
    %306 = vmatmul.mubr.bf16.gmra.mrb[0].mxu0 %v88
    %v307 = vpop.f32.mrb[0].mxu0
    %v308 = vadd.f32 0.0, %v307
    %v309 = vpop.f32.mrb[0].mxu0
    %v310 = vpop.f32.mrb[0].mxu0
    %v311 = vadd.f32 0.0, %v310
    %v312 = vpop.f32.mrb[0].mxu0
    %313 = vdwg.mxu0
    %v314 = vpack.c.bf16 %v191, %v188
    %v315 = vpack.c.bf16 %v199, %v196
    %v316 = vpack.c.bf16 %v207, %v204
    %v317 = vpack.c.bf16 %v215, %v212
    %v318 = vpack.c.bf16 %v223, %v220
    %v319 = vpack.c.bf16 %v231, %v228
    %v320 = vpack.c.bf16 %v239, %v236
    %v321 = vpack.c.bf16 %v247, %v244
    %v322 = vpack.c.bf16 %v255, %v252
    %v323 = vpack.c.bf16 %v263, %v260
    %v324 = vpack.c.bf16 %v271, %v268
    %v325 = vpack.c.bf16 %v279, %v276
    %v326 = vpack.c.bf16 %v287, %v284
    %v327 = vpack.c.bf16 %v295, %v292
    %v328 = vpack.c.bf16 %v303, %v300
    %v329 = vpack.c.bf16 %v311, %v308
    %v346 = vunpack.c.l.b16 %v314
    %v347 = vunpack.c.h.b16 %v314
    %v348 = vunpack.c.l.b16 %v315
    %v349 = vunpack.c.h.b16 %v315
    %v350 = vunpack.c.l.b16 %v316
    %v351 = vunpack.c.h.b16 %v316
    %v352 = vunpack.c.l.b16 %v317
    %v353 = vunpack.c.h.b16 %v317
    %v354 = vunpack.c.l.b16 %v318
    %v355 = vunpack.c.h.b16 %v318
    %v356 = vunpack.c.l.b16 %v319
    %v357 = vunpack.c.h.b16 %v319
    %v358 = vunpack.c.l.b16 %v320
    %v359 = vunpack.c.h.b16 %v320
    %v360 = vunpack.c.l.b16 %v321
    %v361 = vunpack.c.h.b16 %v321
    %v362 = vunpack.c.l.b16 %v322
    %v363 = vunpack.c.h.b16 %v322
    %v364 = vunpack.c.l.b16 %v323
    %v365 = vunpack.c.h.b16 %v323
    %v366 = vunpack.c.l.b16 %v324
    %v367 = vunpack.c.h.b16 %v324
    %v368 = vunpack.c.l.b16 %v325
    %v369 = vunpack.c.h.b16 %v325
    %v370 = vunpack.c.l.b16 %v326
    %v371 = vunpack.c.h.b16 %v326
    %v372 = vunpack.c.l.b16 %v327
    %v373 = vunpack.c.h.b16 %v327
    %v374 = vunpack.c.l.b16 %v328
    %v375 = vunpack.c.h.b16 %v328
    %v376 = vunpack.c.l.b16 %v329
    %v377 = vunpack.c.h.b16 %v329
    %v378 = vpack.c.b16 %v346, %v346
    %v379 = vpack.c.b16 %v347, %v347
    %v380 = vpack.c.b16 %v348, %v348
    %v381 = vpack.c.b16 %v349, %v349
    %v382 = vpack.c.b16 %v350, %v350
    %v383 = vpack.c.b16 %v351, %v351
    %v384 = vpack.c.b16 %v352, %v352
    %v385 = vpack.c.b16 %v353, %v353
    %v386 = vpack.c.b16 %v354, %v354
    %v387 = vpack.c.b16 %v355, %v355
    %v388 = vpack.c.b16 %v356, %v356
    %v389 = vpack.c.b16 %v357, %v357
    %v390 = vpack.c.b16 %v358, %v358
    %v391 = vpack.c.b16 %v359, %v359
    %v392 = vpack.c.b16 %v360, %v360
    %v393 = vpack.c.b16 %v361, %v361
    %v394 = vpack.c.b16 %v362, %v362
    %v395 = vpack.c.b16 %v363, %v363
    %v396 = vpack.c.b16 %v364, %v364
    %v397 = vpack.c.b16 %v365, %v365
    %v398 = vpack.c.b16 %v366, %v366
    %v399 = vpack.c.b16 %v367, %v367
    %v400 = vpack.c.b16 %v368, %v368
    %v401 = vpack.c.b16 %v369, %v369
    %v402 = vpack.c.b16 %v370, %v370
    %v403 = vpack.c.b16 %v371, %v371
    %v404 = vpack.c.b16 %v372, %v372
    %v405 = vpack.c.b16 %v373, %v373
    %v406 = vpack.c.b16 %v374, %v374
    %v407 = vpack.c.b16 %v375, %v375
    %v408 = vpack.c.b16 %v376, %v376
    %v409 = vpack.c.b16 %v377, %v377
    %442 = vst [vmem:[#allocation7] sm:$0xf] %v378
    %443 = vst [vmem:[#allocation7 + $0x4] sm:$0xf] %v379
    %444 = vst [vmem:[#allocation7 + $0x8] sm:$0xf] %v380
    %445 = vst [vmem:[#allocation7 + $0xc] sm:$0xf] %v381
    %446 = vst [vmem:[#allocation7 + $0x10] sm:$0xf] %v382
    %447 = vst [vmem:[#allocation7 + $0x14] sm:$0xf] %v383
    %448 = vst [vmem:[#allocation7 + $0x18] sm:$0xf] %v384
    %449 = vst [vmem:[#allocation7 + $0x1c] sm:$0xf] %v385
    %450 = vst [vmem:[#allocation7 + $0x20] sm:$0xf] %v386
    %451 = vst [vmem:[#allocation7 + $0x24] sm:$0xf] %v387
    %452 = vst [vmem:[#allocation7 + $0x28] sm:$0xf] %v388
    %453 = vst [vmem:[#allocation7 + $0x2c] sm:$0xf] %v389
    %454 = vst [vmem:[#allocation7 + $0x30] sm:$0xf] %v390
    %455 = vst [vmem:[#allocation7 + $0x34] sm:$0xf] %v391
    %456 = vst [vmem:[#allocation7 + $0x38] sm:$0xf] %v392
    %457 = vst [vmem:[#allocation7 + $0x3c] sm:$0xf] %v393
    %458 = vst [vmem:[#allocation7 + $0x40] sm:$0xf] %v394
    %459 = vst [vmem:[#allocation7 + $0x44] sm:$0xf] %v395
    %460 = vst [vmem:[#allocation7 + $0x48] sm:$0xf] %v396
    %461 = vst [vmem:[#allocation7 + $0x4c] sm:$0xf] %v397
    %462 = vst [vmem:[#allocation7 + $0x50] sm:$0xf] %v398
    %463 = vst [vmem:[#allocation7 + $0x54] sm:$0xf] %v399
    %464 = vst [vmem:[#allocation7 + $0x58] sm:$0xf] %v400
    %465 = vst [vmem:[#allocation7 + $0x5c] sm:$0xf] %v401
    %466 = vst [vmem:[#allocation7 + $0x60] sm:$0xf] %v402
    %467 = vst [vmem:[#allocation7 + $0x64] sm:$0xf] %v403
    %468 = vst [vmem:[#allocation7 + $0x68] sm:$0xf] %v404
    %469 = vst [vmem:[#allocation7 + $0x6c] sm:$0xf] %v405
    %470 = vst [vmem:[#allocation7 + $0x70] sm:$0xf] %v406
    %471 = vst [vmem:[#allocation7 + $0x74] sm:$0xf] %v407
    %472 = vst [vmem:[#allocation7 + $0x78] sm:$0xf] %v408
    %473 = vst [vmem:[#allocation7 + $0x7c] sm:$0xf] %v409
    // Predicated region
    $region18: #{tpu_custom_call.1} parent=1 // pred_check
      _
    $region19: #{tpu_custom_call.1} parent=1 // pred_check_branch
      %475 = sbr.rel (0) target = $region21
    $region20: #{tpu_custom_call.1} parent=1 // pred_region
      %s477 = ssub.s32 2048, 2048
      %478 = vsyncadd [#allocation4], %s477
      %s479 = sshll.u32 [#allocation7], 4
      %s480 = int_to_ptr.vmem [resolvable:$true] %s479
      %485 = dma.vmem_to_hbm [thread:$0]  %s480, 2048, %s2, [#allocation4], 64, 64, 4
    $region21: #{tpu_custom_call.1} parent=1 // pred_fallthru
      _
    // Predicated region
    $region22: #{tpu_custom_call.1} parent=1 // pred_check
      _
    $region23: #{tpu_custom_call.1} parent=1 // pred_check_branch
      %487 = sbr.rel (0) target = $region25
    $region24: #{tpu_custom_call.1} parent=1 // pred_region
      %488 = dma.done [#allocation4], 2048
    $region25: #{tpu_custom_call.1} parent=1 // pred_fallthru
      _
    %489 = vsyncpa [#allocation3], 1
    %490 = vsyncpa [#allocation6], 1
    %491 = vsyncpa [#allocation4], 1

</llo_original>
